<compile_context>
chip_gen: v5e
topology: v5e:2x2
jax: 0.10.0
libtpu: 0.0.40
codegen_flags: <defaults>
</compile_context>

<pallas_src>
import functools

import jax
import jax.numpy as jnp
from jax.experimental import pallas as pl
from jax.experimental.pallas import tpu as pltpu


def _actnorm_kernel(scale_ref, shift_ref, x_ref, m_ref, z_ref):
    # scale_ref/shift_ref: (C, 1) f32; x_ref/z_ref: (1, C, TT); m_ref: (1, 1, TT)
    x = x_ref[0].astype(jnp.float32)          # (C, TT)
    m = m_ref[0].astype(jnp.float32)          # (1, TT) -> broadcast over channels
    z = (x * scale_ref[...] + shift_ref[...]) * m
    z_ref[0] = z.astype(z_ref.dtype)


def _pick_block_t(t: int) -> int:
    # 128-multiple lane tile for unmasked vst; fall back to full-extent block
    # when T itself is not 128-aligned.
    # TODO(synk): pad T to a multiple of 128 in the caller for fully unmasked stores.
    if t % 128 != 0:
        return t
    return min(t, 2048)


@functools.partial(jax.jit, static_argnames=("reverse",))
def act_norm(x, logs, bias, x_mask=None, *, reverse=False):
    """ActNorm forward.  x: (B, C, T); logs/bias: (1, C, 1) (any broadcastable shape)."""
    b, c, t = x.shape
    if x_mask is None:
        x_mask = jnp.ones((b, 1, t), dtype=x.dtype)
    x_len = jnp.sum(x_mask, axis=(1, 2))                       # (B,)

    logs_v = logs.reshape(c).astype(jnp.float32)
    bias_v = bias.reshape(c).astype(jnp.float32)
    if reverse:
        scale = jnp.exp(-logs_v)
        shift = -bias_v * scale                                # (x - b)*e^{-s} = x*scale + shift
        logdet = None
    else:
        scale = jnp.exp(logs_v)
        shift = bias_v
        logdet = (jnp.sum(logs_v) * x_len).astype(x.dtype)

    scale2 = scale.reshape(c, 1)
    shift2 = shift.reshape(c, 1)

    tt = _pick_block_t(t)
    grid = (b, pl.cdiv(t, tt))

    # TODO(synk): for C < 8, pack multiple batch rows per block to fill the 8-sublane vreg.
    z = pl.pallas_call(
        _actnorm_kernel,
        out_shape=jax.ShapeDtypeStruct((b, c, t), x.dtype),
        grid_spec=pltpu.PrefetchScalarGridSpec(
            num_scalar_prefetch=0,
            grid=grid,
            in_specs=[
                pl.BlockSpec((c, 1), lambda i, j: (0, 0)),       # scale (resident)
                pl.BlockSpec((c, 1), lambda i, j: (0, 0)),       # shift (resident)
                pl.BlockSpec((1, c, tt), lambda i, j: (i, 0, j)),  # x tile
                pl.BlockSpec((1, 1, tt), lambda i, j: (i, 0, j)),  # mask tile
            ],
            out_specs=pl.BlockSpec((1, c, tt), lambda i, j: (i, 0, j)),
        ),
        compiler_params=pltpu.CompilerParams(
            dimension_semantics=("parallel", "parallel"),
        ),
    )(scale2, shift2, x, x_mask)

    return z, logdet


def act_norm_initialize(x, x_mask=None, eps=1e-6):
    """Plain-JAX equivalent of ActNorm.initialize (data-dependent init, ddi=True)."""
    b, c, t = x.shape
    if x_mask is None:
        x_mask = jnp.ones((b, 1, t), dtype=x.dtype)
    denom = jnp.sum(x_mask, axis=(0, 2))
    m = jnp.sum(x * x_mask, axis=(0, 2)) / denom
    m_sq = jnp.sum(x * x * x_mask, axis=(0, 2)) / denom
    v = m_sq - m ** 2
    logs = 0.5 * jnp.log(jnp.maximum(v, eps))
    bias_init = (-m * jnp.exp(-logs)).reshape(1, c, 1)
    logs_init = (-logs).reshape(1, c, 1)
    return logs_init, bias_init


def _reference(x, logs, bias, x_mask=None, reverse=False):
    """Pure-JAX reference of the PyTorch forward."""
    b, c, t = x.shape
    if x_mask is None:
        x_mask = jnp.ones((b, 1, t), dtype=x.dtype)
    x_len = jnp.sum(x_mask, axis=(1, 2))
    logs_b = logs.reshape(1, c, 1)
    bias_b = bias.reshape(1, c, 1)
    if reverse:
        z = (x - bias_b) * jnp.exp(-logs_b) * x_mask
        logdet = None
    else:
        z = (bias_b + jnp.exp(logs_b) * x) * x_mask
        logdet = jnp.sum(logs) * x_len
    return z, logdet


if __name__ == "__main__":
    key = jax.random.PRNGKey(0)
    k_x, k_l, k_b = jax.random.split(key, 3)

    b, c, t = 2, 8, 256
    x = jax.random.normal(k_x, (b, c, t), dtype=jnp.float32)
    logs = 0.1 * jax.random.normal(k_l, (1, c, 1), dtype=jnp.float32)
    bias = 0.1 * jax.random.normal(k_b, (1, c, 1), dtype=jnp.float32)
    lengths = jnp.array([256, 200], dtype=jnp.int32)
    x_mask = (jnp.arange(t)[None, None, :] < lengths[:, None, None]).astype(jnp.float32)

    # forward with mask
    z, logdet = act_norm(x, logs, bias, x_mask)
    jax.block_until_ready(z)
    jax.block_until_ready(logdet)

    z_ref, logdet_ref = _reference(x, logs, bias, x_mask)
    assert z.shape == (b, c, t) and logdet.shape == (b,)
    assert jnp.allclose(z, z_ref, atol=1e-5, rtol=1e-5)
    assert jnp.allclose(logdet, logdet_ref, atol=1e-5, rtol=1e-5)

    # reverse path inverts forward (inside the mask)
    x_rec, logdet_rev = act_norm(z, logs, bias, x_mask, reverse=True)
    jax.block_until_ready(x_rec)
    assert logdet_rev is None
    assert jnp.allclose(x_rec, x * x_mask, atol=1e-5, rtol=1e-5)

    # default mask (None)
    z2, logdet2 = act_norm(x, logs, bias)
    jax.block_until_ready(z2)
    z2_ref, logdet2_ref = _reference(x, logs, bias)
    assert jnp.allclose(z2, z2_ref, atol=1e-5, rtol=1e-5)
    assert jnp.allclose(logdet2, logdet2_ref, atol=1e-5, rtol=1e-5)

    print("KERNEL_OK")
</pallas_src>

<mosaic_0001>
module attributes {stable_mosaic.version = 11 : i64} {
  func.func @_actnorm_kernel(%arg0: i32, %arg1: i32, %arg2: memref<8x1xf32, #tpu.memory_space<vmem>>, %arg3: memref<8x1xf32, #tpu.memory_space<vmem>>, %arg4: memref<1x8x256xf32, #tpu.memory_space<vmem>>, %arg5: memref<1x1x256xf32, #tpu.memory_space<vmem>>, %arg6: memref<1x8x256xf32, #tpu.memory_space<vmem>>) attributes {dimension_semantics = [#tpu.dimension_semantics<parallel>, #tpu.dimension_semantics<parallel>], iteration_bounds = array<i64: 2, 1>, scalar_prefetch = 0 : i64, scratch_operands = 0 : i64, tpu.core_type = #tpu.core_type<tc>, window_params = [{pipeline_mode = #tpu.pipeline_mode<synchronous>, transform_indices = @transform_0, window_bounds = array<i64: 8, 1>}, {pipeline_mode = #tpu.pipeline_mode<synchronous>, transform_indices = @transform_1, window_bounds = array<i64: 8, 1>}, {transform_indices = @transform_2, window_bounds = array<i64: 1, 8, 256>}, {transform_indices = @transform_3, window_bounds = array<i64: 1, 1, 256>}, {transform_indices = @transform_4, window_bounds = array<i64: 1, 8, 256>}]} {
    %c0 = arith.constant 0 : index
    %c0_0 = arith.constant 0 : index
    %c0_1 = arith.constant 0 : index
    %0 = vector.load %arg4[%c0, %c0_0, %c0_1] : memref<1x8x256xf32, #tpu.memory_space<vmem>>, vector<1x8x256xf32>
    %1 = vector.shape_cast %0 : vector<1x8x256xf32> to vector<8x256xf32>
    %c0_2 = arith.constant 0 : index
    %c0_3 = arith.constant 0 : index
    %c0_4 = arith.constant 0 : index
    %2 = vector.load %arg5[%c0_2, %c0_3, %c0_4] : memref<1x1x256xf32, #tpu.memory_space<vmem>>, vector<1x1x256xf32>
    %3 = vector.shape_cast %2 : vector<1x1x256xf32> to vector<1x256xf32>
    %c0_5 = arith.constant 0 : index
    %c0_6 = arith.constant 0 : index
    %4 = vector.load %arg2[%c0_5, %c0_6] : memref<8x1xf32, #tpu.memory_space<vmem>>, vector<8x1xf32>
    %5 = vector.broadcast %4 : vector<8x1xf32> to vector<8x256xf32>
    %6 = arith.mulf %1, %5 : vector<8x256xf32>
    %c0_7 = arith.constant 0 : index
    %c0_8 = arith.constant 0 : index
    %7 = vector.load %arg3[%c0_7, %c0_8] : memref<8x1xf32, #tpu.memory_space<vmem>>, vector<8x1xf32>
    %8 = vector.broadcast %7 : vector<8x1xf32> to vector<8x256xf32>
    %9 = arith.addf %6, %8 : vector<8x256xf32>
    %10 = vector.broadcast %3 : vector<1x256xf32> to vector<8x256xf32>
    %11 = arith.mulf %9, %10 : vector<8x256xf32>
    %c0_9 = arith.constant 0 : index
    %c0_10 = arith.constant 0 : index
    %c0_11 = arith.constant 0 : index
    %12 = vector.load %arg6[%c0_9, %c0_10, %c0_11] : memref<1x8x256xf32, #tpu.memory_space<vmem>>, vector<1x8x256xf32>
    %13 = vector.shape_cast %12 : vector<1x8x256xf32> to vector<8x256xf32>
    %14 = vector.shape_cast %11 : vector<8x256xf32> to vector<1x8x256xf32>
    tpu.vector_store %arg6[%c0_9, %c0_10, %c0_11], %14 {strides = array<i32>} : memref<1x8x256xf32, #tpu.memory_space<vmem>>, vector<1x8x256xf32>,
    return
  }
  func.func @transform_0(%arg0: i32, %arg1: i32) -> (i32, i32) {
    %c0_i32 = arith.constant 0 : i32
    %c0_i32_0 = arith.constant 0 : i32
    %c0_i32_1 = arith.constant 0 : i32
    return %c0_i32, %c0_i32_0 : i32, i32
  }
  func.func @transform_1(%arg0: i32, %arg1: i32) -> (i32, i32) {
    %c0_i32 = arith.constant 0 : i32
    %c0_i32_0 = arith.constant 0 : i32
    %c0_i32_1 = arith.constant 0 : i32
    return %c0_i32, %c0_i32_0 : i32, i32
  }
  func.func @transform_2(%arg0: i32, %arg1: i32) -> (i32, i32, i32) {
    %c0_i32 = arith.constant 0 : i32
    %c0_i32_0 = arith.constant 0 : i32
    return %arg0, %c0_i32, %arg1 : i32, i32, i32
  }
  func.func @transform_3(%arg0: i32, %arg1: i32) -> (i32, i32, i32) {
    %c0_i32 = arith.constant 0 : i32
    %c0_i32_0 = arith.constant 0 : i32
    return %arg0, %c0_i32, %arg1 : i32, i32, i32
  }
  func.func @transform_4(%arg0: i32, %arg1: i32) -> (i32, i32, i32) {
    %c0_i32 = arith.constant 0 : i32
    %c0_i32_0 = arith.constant 0 : i32
    return %arg0, %c0_i32, %arg1 : i32, i32, i32
  }
}

</mosaic_0001>

<llo_original>
// kernel: act_norm.1
$region0: #{act_norm.1}
  #allocation0 [shape = 'u32[]', space=smem, size = 0x4, offset = 0x4, fixed_abs, tag = 'smem constant byte address 0x4 - core index']
  #allocation1 [shape = 'u32[72,128]{1,0:T(1,128)}', space=vmem, size = 0x9000, scoped, tag = 'internal scratch']
  %s0 = inlined_call_operand.vmem [shape: f32[8,1], index: 0, kind: input, shape index: {}]
  %s1 = inlined_call_operand.vmem [shape: f32[8,1], index: 1, kind: input, shape index: {}]
  %s2 = inlined_call_operand.hbm [shape: f32[2,8,256], index: 2, kind: input, shape index: {}]
  %s3 = inlined_call_operand.vmem [shape: f32[2,1,256], index: 3, kind: input, shape index: {}]
  %s4 = inlined_call_operand.hbm [shape: f32[2,8,256], index: 4, kind: output, shape index: {}]
  %s5 = sld [smem:[#allocation0]]
  $region53: #{act_norm.1} parent=0
    _
  %s7 = ssub.s32 1, %s5
  %s8 = scalar_select 0, %s7, %s5
  $region1: #{act_norm.1} parent=0
    #allocation2 [shape = 'u8[16384]{0}', space=vmem, size = 0x4000, scoped, tag = 'input window, operand 2']
    #allocation3 [shape = 's32[2]{0}', space=sflag, size = 0x8, scoped, tag = 'scoped memory for act_norm.1']
    #allocation4 [shape = 's32[2]{0}', space=sflag, size = 0x8, scoped, tag = 'scoped memory for act_norm.1']
    #allocation5 [shape = 'u8[16384]{0}', space=vmem, size = 0x4000, scoped, tag = 'output window, operand 0']
    %9 = vsyncpa [#allocation3], 0
    %s10 = scalar_lea.sflag [#allocation3], 1
    %11 = vsyncpa %s10, 0
    %12 = vsyncpa [#allocation4], 0
    %s13 = scalar_lea.sflag [#allocation4], 1
    %14 = vsyncpa %s13, 0
    loop: start=0, step=1, limit=4
    $region2: #{act_norm.1} parent=1 // loop_pre_header
      _
    $region3: #{act_norm.1} parent=1 // loop_header
      %s16 = sphi 0, %s20
      %p17 = scmp.ge.s32.totalorder %s16, 4
      %s23 = sphi 0, %s35
      %s24 = sphi 0, %s31
      %s25 = sphi 0, %s23
      %s26 = sphi 0, %s24
      %s27 = sphi 0, %s25
      %s28 = sphi 0, %s26
      %s36 = sphi 0, %s36
      %s38 = sphi 0, %s36
      %s39 = sphi 0, %s38
      %s53 = sphi 0, %s39
      %s57 = sphi 0, %s57
      %s59 = sphi 0, %s57
      %s60 = sphi 0, %s59
      %s74 = sphi 0, %s60
      %s82 = sphi 0, %s84
      %s85 = sphi 0, %s82
      %s86 = sphi 0, %s85
      %s102 = sphi 0, %s86
      %s110 = sphi 0, %s112
      %s113 = sphi 0, %s110
      %s114 = sphi 0, %s113
      %s130 = sphi 0, %s114
      %s138 = sphi 0, %s140
      %s141 = sphi 0, %s138
      %s142 = sphi 0, %s141
      %s158 = sphi 0, %s142
    $region4: #{act_norm.1} parent=1 // loop_header_branch
      %19 = sbr.rel (%p17) target = $region8
    $region5: #{act_norm.1} parent=1 // loop_body
      %s21 = ssub.s32 %s16, 1
      %s22 = ssub.s32 %s16, 2
      %s29 = sadd.s32 1, %s24
      %p30 = scmp.ge.s32.totalorder %s29, 1
      %s31 = scalar_select %p30, 0, %s29
      %s32 = sadd.s32 1, %s23
      %s33 = scalar_select %p30, %s32, %s23
      %p34 = scmp.ge.s32.totalorder %s33, 2
      %s35 = scalar_select %p34, 0, %s33
      %s37 = sadd.s32 %s36, 1
      %p40 = scmp.eq.s32.totalorder %s16, 1
      %p41 = scmp.ne.s32.totalorder %s36, %s38
      %p42 = scmp.eq.s32.totalorder %s16, 0
      %p43 = por %p41, %p42
      %p44 = scmp.ne.s32.totalorder %s36, %s38
      %p45 = scmp.eq.s32.totalorder %s21, 1
      %p46 = por %p44, %p45
      %p47 = scmp.ne.s32.totalorder %s38, %s39
      %p48 = scmp.eq.s32.totalorder %s21, 0
      %p49 = por %p47, %p48
      %p50 = scmp.ne.s32.totalorder %s38, %s39
      %p51 = scmp.eq.s32.totalorder %s22, 1
      %p52 = por %p50, %p51
      %p54 = scmp.ne.s32.totalorder %s39, %s53
      %p55 = scmp.eq.s32.totalorder %s22, 0
      %p56 = por %p54, %p55
      %s58 = sadd.s32 %s57, 1
      %p61 = scmp.eq.s32.totalorder %s16, 1
      %p62 = scmp.ne.s32.totalorder %s57, %s59
      %p63 = scmp.eq.s32.totalorder %s16, 0
      %p64 = por %p62, %p63
      %p65 = scmp.ne.s32.totalorder %s57, %s59
      %p66 = scmp.eq.s32.totalorder %s21, 1
      %p67 = por %p65, %p66
      %p68 = scmp.ne.s32.totalorder %s59, %s60
      %p69 = scmp.eq.s32.totalorder %s21, 0
      %p70 = por %p68, %p69
      %p71 = scmp.ne.s32.totalorder %s59, %s60
      %p72 = scmp.eq.s32.totalorder %s22, 1
      %p73 = por %p71, %p72
      %p75 = scmp.ne.s32.totalorder %s60, %s74
      %p76 = scmp.eq.s32.totalorder %s22, 0
      %p77 = por %p75, %p76
      %s78 = ssub.s32 %s23, %s35
      %s79 = ssub.s32 %s24, %s31
      %s80 = sor.u32 %s78, %s79
      %p81 = scmp.eq.s32.totalorder %s80, 0
      %s83 = sadd.s32 %s82, 1
      %s84 = scalar_select %p81, %s82, %s83
      %p87 = pneg %p81
      %p88 = scmp.eq.s32.totalorder %s16, 1
      %p89 = por %p87, %p88
      %p90 = scmp.ne.s32.totalorder %s82, %s85
      %p91 = scmp.eq.s32.totalorder %s16, 0
      %p92 = por %p90, %p91
      %p93 = scmp.ne.s32.totalorder %s82, %s85
      %p94 = scmp.eq.s32.totalorder %s21, 1
      %p95 = por %p93, %p94
      %p96 = scmp.ne.s32.totalorder %s85, %s86
      %p97 = scmp.eq.s32.totalorder %s21, 0
      %p98 = por %p96, %p97
      %p99 = scmp.ne.s32.totalorder %s85, %s86
      %p100 = scmp.eq.s32.totalorder %s22, 1
      %p101 = por %p99, %p100
      %p103 = scmp.ne.s32.totalorder %s86, %s102
      %p104 = scmp.eq.s32.totalorder %s22, 0
      %p105 = por %p103, %p104
      %s106 = ssub.s32 %s23, %s35
      %s107 = ssub.s32 %s24, %s31
      %s108 = sor.u32 %s106, %s107
      %p109 = scmp.eq.s32.totalorder %s108, 0
      %s111 = sadd.s32 %s110, 1
      %s112 = scalar_select %p109, %s110, %s111
      %p115 = pneg %p109
      %p116 = scmp.eq.s32.totalorder %s16, 1
      %p117 = por %p115, %p116
      %p118 = scmp.ne.s32.totalorder %s110, %s113
      %p119 = scmp.eq.s32.totalorder %s16, 0
      %p120 = por %p118, %p119
      %p121 = scmp.ne.s32.totalorder %s110, %s113
      %p122 = scmp.eq.s32.totalorder %s21, 1
      %p123 = por %p121, %p122
      %p124 = scmp.ne.s32.totalorder %s113, %s114
      %p125 = scmp.eq.s32.totalorder %s21, 0
      %p126 = por %p124, %p125
      %p127 = scmp.ne.s32.totalorder %s113, %s114
      %p128 = scmp.eq.s32.totalorder %s22, 1
      %p129 = por %p127, %p128
      %p131 = scmp.ne.s32.totalorder %s114, %s130
      %p132 = scmp.eq.s32.totalorder %s22, 0
      %p133 = por %p131, %p132
      %s134 = ssub.s32 %s23, %s35
      %s135 = ssub.s32 %s24, %s31
      %s136 = sor.u32 %s134, %s135
      %p137 = scmp.eq.s32.totalorder %s136, 0
      %s139 = sadd.s32 %s138, 1
      %s140 = scalar_select %p137, %s138, %s139
      %p143 = pneg %p137
      %p144 = scmp.eq.s32.totalorder %s16, 1
      %p145 = por %p143, %p144
      %p146 = scmp.ne.s32.totalorder %s138, %s141
      %p147 = scmp.eq.s32.totalorder %s16, 0
      %p148 = por %p146, %p147
      %p149 = scmp.ne.s32.totalorder %s138, %s141
      %p150 = scmp.eq.s32.totalorder %s21, 1
      %p151 = por %p149, %p150
      %p152 = scmp.ne.s32.totalorder %s141, %s142
      %p153 = scmp.eq.s32.totalorder %s21, 0
      %p154 = por %p152, %p153
      %p155 = scmp.ne.s32.totalorder %s141, %s142
      %p156 = scmp.eq.s32.totalorder %s22, 1
      %p157 = por %p155, %p156
      %p159 = scmp.ne.s32.totalorder %s142, %s158
      %p160 = scmp.eq.s32.totalorder %s22, 0
      %p161 = por %p159, %p160
      %p162 = scmp.le.s32.totalorder 1, %s16
      %p163 = scmp.lt.s32.totalorder %s16, 3
      %p164 = pnand %p162, %p163
      %p165 = pneg %p164
      // Predicated region
      $region9: #{act_norm.1} parent=5 // pred_check
        _
      $region10: #{act_norm.1} parent=5 // pred_check_branch
        %167 = sbr.rel (%p164) target = $region12
      $region11: #{act_norm.1} parent=5 // pred_region
        %s168 = ssub.s32 %s16, 1
        // Predicated region
        $region13: #{act_norm.1} parent=11 // pred_check
          %p169 = pneg %p49
        $region14: #{act_norm.1} parent=11 // pred_check_branch
          %171 = sbr.rel (%p169) target = $region16
        $region15: #{act_norm.1} parent=11 // pred_region
          _
        $region16: #{act_norm.1} parent=11 // pred_fallthru
          _
        // Predicated region
        $region17: #{act_norm.1} parent=11 // pred_check
          %p172 = pneg %p70
        $region18: #{act_norm.1} parent=11 // pred_check_branch
          %174 = sbr.rel (%p172) target = $region20
        $region19: #{act_norm.1} parent=11 // pred_region
          _
        $region20: #{act_norm.1} parent=11 // pred_fallthru
          _
      $region12: #{act_norm.1} parent=5 // pred_fallthru
        _
      %p175 = scmp.lt.s32.totalorder %s16, 2
      // Predicated region
      $region21: #{act_norm.1} parent=5 // pred_check
        %p176 = pneg %p175
      $region22: #{act_norm.1} parent=5 // pred_check_branch
        %178 = sbr.rel (%p176) target = $region24
      $region23: #{act_norm.1} parent=5 // pred_region
        // Predicated region
        $region25: #{act_norm.1} parent=23 // pred_check
          %p179 = pneg %p92
        $region26: #{act_norm.1} parent=23 // pred_check_branch
          %181 = sbr.rel (%p179) target = $region28
        $region27: #{act_norm.1} parent=23 // pred_region
          %s182 = sand.u32 %s82, 1
          %s183 = scalar_lea.sflag [#allocation3], %s182
          %s184 = sand.u32 %s82, 1
          %s185 = smul.addr %s184, 16
          %s186 = scalar_lea.vmem [#allocation2], %s185
          %s187 = smul.u32 2, %s24
          %189 = vsyncadd %s183, 0
          %s190 = smul.addr %s23, 2
          %s191 = sadd.s32 %s187, %s190
          %s192 = smul.addr %s191, 8
          %s193 = scalar_lea.hbm %s2, %s192
          %s195 = sshll.u32 %s193, 4
          %s196 = int_to_ptr.hbm [resolvable:$true] %s195
          %s197 = sshll.u32 %s186, 4
          %s198 = int_to_ptr.vmem [resolvable:$true] %s197
          %200 = dma.hbm_to_vmem [thread:$0]  %s196, 256, %s198, %s183
        $region28: #{act_norm.1} parent=23 // pred_fallthru
          _
        // Predicated region
        $region29: #{act_norm.1} parent=23 // pred_check
          %p201 = pneg %p120
        $region30: #{act_norm.1} parent=23 // pred_check_branch
          %203 = sbr.rel (%p201) target = $region32
        $region31: #{act_norm.1} parent=23 // pred_region
          %s204 = smul.u32 2, %s24
          %p205 = scmp.lt.s32.totalorder %s23, 1
          %s206 = scalar_select %p205, %s23, 1
          %p207 = scmp.lt.s32.totalorder %s204, 1
          %s208 = scalar_select %p207, %s204, 1
          %s209 = smul.addr %s206, 2
          %s210 = sadd.s32 %s208, %s209
          %s211 = scalar_lea.vmem %s3, %s210
          %s212 = smul.u32 2, %s24
        $region32: #{act_norm.1} parent=23 // pred_fallthru
          _
      $region24: #{act_norm.1} parent=5 // pred_fallthru
        _
      %p213 = scmp.le.s32.totalorder 1, %s16
      %p214 = scmp.lt.s32.totalorder %s16, 3
      %p215 = pnand %p213, %p214
      %p216 = pneg %p215
      // Predicated region
      $region33: #{act_norm.1} parent=5 // pred_check
        _
      $region34: #{act_norm.1} parent=5 // pred_check_branch
        %218 = sbr.rel (%p215) target = $region36
      $region35: #{act_norm.1} parent=5 // pred_region
        %s219 = ssub.s32 %s16, 1
        %s220 = sand.u32 %s85, 1
        %s221 = scalar_lea.sflag [#allocation3], %s220
        %s222 = sand.u32 %s85, 1
        %s223 = smul.addr %s222, 16
        %s224 = scalar_lea.vmem [#allocation2], %s223
        // Predicated region
        $region37: #{act_norm.1} parent=35 // pred_check
          %p225 = pneg %p98
        $region38: #{act_norm.1} parent=35 // pred_check_branch
          %227 = sbr.rel (%p225) target = $region40
        $region39: #{act_norm.1} parent=35 // pred_region
          %229 = dma.done %s221, 256
        $region40: #{act_norm.1} parent=35 // pred_fallthru
          _
        %p230 = pneg %p49
        %p231 = pneg %p46
        %p232 = pneg %p70
        %p233 = pneg %p67
        %s234 = sand.u32 %s85, 1
        %s235 = scalar_lea.sflag [#allocation3], %s234
        %s236 = sand.u32 %s85, 1
        %s237 = smul.addr %s236, 16
        %s238 = scalar_lea.vmem [#allocation2], %s237
        %p239 = pneg %p98
        %p240 = pneg %p95
        %s241 = smul.u32 2, %s26
        %p242 = scmp.lt.s32.totalorder %s25, 1
        %s243 = scalar_select %p242, %s25, 1
        %p244 = scmp.lt.s32.totalorder %s241, 1
        %s245 = scalar_select %p244, %s241, 1
        %s246 = smul.addr %s243, 2
        %s247 = sadd.s32 %s245, %s246
        %s248 = scalar_lea.vmem %s3, %s247
        %p249 = pneg %p126
        %p250 = pneg %p123
        %p251 = pneg %p154
        %p252 = pneg %p151
        %s253 = sand.u32 %s141, 1
        %s254 = scalar_lea.sflag [#allocation4], %s253
        %s255 = sand.u32 %s141, 1
        %s256 = smul.addr %s255, 16
        %s257 = scalar_lea.vmem [#allocation5], %s256
        %s258 = smul.u32 2, %s26
        %s259 = smul.u32 2, %s26
        %p260 = scmp.lt.s32.totalorder %s25, 1
        %s261 = scalar_select %p260, %s25, 1
        %p262 = scmp.lt.s32.totalorder %s259, 1
        %s263 = scalar_select %p262, %s259, 1
        %s264 = smul.addr %s261, 2
        %s265 = sadd.s32 %s263, %s264
        %s266 = scalar_lea.vmem %s3, %s265
        %s267 = smul.u32 2, %s26
        %s268 = smul.u32 2, %s26
        %v269 = vld [vmem:[%s224] sm:$0xff]
        %v270 = vld [vmem:[%s224 + $0x8] sm:$0xff]
        %v271 = vld [vmem:[%s266] sm:$0x3]
        %v272 = vld [vmem:[%s0] sm:$0xff]
        %274 = vset.pattern.permute.xlu0 0
        %275 = vperm.xlu0 %274, %v272
        %v276 = vpop.permute.xlu0 %275
        %v278 = vmul.f32 %v269, %v276
        %v279 = vmul.f32 %v270, %v276
        %v280 = vld [vmem:[%s1] sm:$0xff]
        %282 = vset.pattern.permute.xlu0 0
        %283 = vperm.xlu0 %282, %v280
        %v284 = vpop.permute.xlu0 %283
        %v286 = vadd.f32 %v278, %v284
        %v287 = vadd.f32 %v279, %v284
        %v289 = vperm.slane %v271, 0
        %v290 = vperm.slane %v271, 1
        %v293 = vmul.f32 %v286, %v289
        %v294 = vmul.f32 %v287, %v290
        %295 = vst [vmem:[%s257] sm:$0xff] %v293
        %296 = vst [vmem:[%s257 + $0x8] sm:$0xff] %v294
        %s297 = sand.u32 %s141, 1
        %s298 = scalar_lea.sflag [#allocation4], %s297
        %s299 = sand.u32 %s141, 1
        %s300 = smul.addr %s299, 16
        %s301 = scalar_lea.vmem [#allocation5], %s300
        // Predicated region
        $region41: #{act_norm.1} parent=35 // pred_check
          %p302 = pneg %p151
        $region42: #{act_norm.1} parent=35 // pred_check_branch
          %304 = sbr.rel (%p302) target = $region44
        $region43: #{act_norm.1} parent=35 // pred_region
          %s305 = smul.u32 2, %s26
          %307 = vsyncadd %s298, 0
          %s308 = smul.addr %s25, 2
          %s309 = sadd.s32 %s305, %s308
          %s310 = smul.addr %s309, 8
          %s311 = scalar_lea.hbm %s4, %s310
          %s313 = sshll.u32 %s301, 4
          %s314 = int_to_ptr.vmem [resolvable:$true] %s313
          %s315 = sshll.u32 %s311, 4
          %s316 = int_to_ptr.hbm [resolvable:$true] %s315
          %318 = dma.vmem_to_hbm [thread:$0]  %s314, 256, %s316, %s298
        $region44: #{act_norm.1} parent=35 // pred_fallthru
          _
      $region36: #{act_norm.1} parent=5 // pred_fallthru
        _
      %p319 = scmp.le.s32.totalorder 2, %s16
      // Predicated region
      $region45: #{act_norm.1} parent=5 // pred_check
        %p320 = pneg %p319
      $region46: #{act_norm.1} parent=5 // pred_check_branch
        %322 = sbr.rel (%p320) target = $region48
      $region47: #{act_norm.1} parent=5 // pred_region
        %s323 = ssub.s32 %s16, 2
        // Predicated region
        $region49: #{act_norm.1} parent=47 // pred_check
          %p324 = pneg %p157
        $region50: #{act_norm.1} parent=47 // pred_check_branch
          %326 = sbr.rel (%p324) target = $region52
        $region51: #{act_norm.1} parent=47 // pred_region
          %s327 = sand.u32 %s142, 1
          %s328 = scalar_lea.sflag [#allocation4], %s327
          %s329 = sand.u32 %s142, 1
          %s330 = smul.addr %s329, 16
          %s331 = scalar_lea.vmem [#allocation5], %s330
          %333 = dma.done %s328, 256
        $region52: #{act_norm.1} parent=47 // pred_fallthru
          _
      $region48: #{act_norm.1} parent=5 // pred_fallthru
        _
    $region6: #{act_norm.1} parent=1 // loop_footer
      %s20 = sadd.s32 1, %s16
    $region7: #{act_norm.1} parent=1 // loop_footer_branch
      %15 = sbr.rel target = $region3
    $region8: #{act_norm.1} parent=1 // loop_exit
      _
    %334 = vsyncpa [#allocation3], 1
    %s335 = scalar_lea.sflag [#allocation3], 1
    %336 = vsyncpa %s335, 1
    %337 = vsyncpa [#allocation4], 1
    %s338 = scalar_lea.sflag [#allocation4], 1
    %339 = vsyncpa %s338, 1

</llo_original>
